<compile_context>
chip_gen: v7x
topology: tpu7x:2x2x1
jax: 0.10.0
libtpu: 0.0.40
codegen_flags: <defaults>
</compile_context>

<pallas_src>
from functools import partial

import jax
import jax.numpy as jnp
from jax import lax
from jax.experimental import pallas as pl
from jax.experimental.pallas import tpu as pltpu

EPS = 1e-5
LANE = 128


def _round_up(x, m):
    return (x + m - 1) // m * m


def linear_relu_stats_kernel(x_ref, w_ref, b_ref, h_ref, sum_ref, ssq_ref, *,
                             n_rows, tile_n, masked):
    """h = relu(x @ W + b); accumulate per-feature partial sum / sumsq."""
    h = jnp.dot(x_ref[...], w_ref[...], preferred_element_type=jnp.float32)
    h = jnp.maximum(h + b_ref[...], 0.0)
    h_ref[...] = h.astype(h_ref.dtype)

    @pl.when(pl.program_id(0) == 0)
    def _():
        sum_ref[...] = jnp.zeros_like(sum_ref)
        ssq_ref[...] = jnp.zeros_like(ssq_ref)

    if masked:  # zero out batch-padding rows so they don't pollute BN stats
        row = (lax.broadcasted_iota(jnp.int32, h.shape, 0)
               + pl.program_id(0) * tile_n)
        h = jnp.where(row < n_rows, h, 0.0)

    # Keep the 8-sublane structure: VPU-only partial sums, defer the final
    # cross-sublane reduce to the (tiny) wrapper finalize.
    hp = h.reshape(tile_n // 8, 8, h.shape[-1])
    sum_ref[...] += jnp.sum(hp, axis=0)
    ssq_ref[...] += jnp.sum(hp * hp, axis=0)


def normalize_kernel(h_ref, scale_shift_ref, o_ref):
    """y = h * scale + shift  (BN mean/var/gamma/beta folded into 2 rows)."""
    scale = scale_shift_ref[0:1, :]
    shift = scale_shift_ref[1:2, :]
    o_ref[...] = (h_ref[...] * scale + shift).astype(o_ref.dtype)


def fully_connected_layer(x, w, b, gamma, beta, *, tile_n=256):
    """x: (N, ch_in) f32. w: (ch_in, ch_out). b/gamma/beta: (1, ch_out)."""
    n, ch_in = x.shape
    ch_out = w.shape[1]
    f32 = jnp.float32

    # ---- lane-dense padding of the feature dim + batch tiling ----
    c_pad = _round_up(ch_out, LANE)
    tn = min(tile_n, _round_up(n, 8))
    n_pad = _round_up(n, tn)
    grid_n = n_pad // tn
    masked = n_pad != n

    x_p = jnp.zeros((n_pad, ch_in), f32).at[:n, :].set(x.astype(f32))
    w_p = jnp.zeros((ch_in, c_pad), f32).at[:, :ch_out].set(w.astype(f32))
    b_p = jnp.zeros((1, c_pad), f32).at[:, :ch_out].set(b.reshape(1, ch_out))
    g_p = jnp.zeros((1, c_pad), f32).at[:, :ch_out].set(gamma.reshape(1, ch_out))
    be_p = jnp.zeros((1, c_pad), f32).at[:, :ch_out].set(beta.reshape(1, ch_out))

    # ---- pass 1: Linear + ReLU, accumulate per-feature sum / sumsq ----
    h, sum8, ssq8 = pl.pallas_call(
        partial(linear_relu_stats_kernel, n_rows=n, tile_n=tn, masked=masked),
        out_shape=(jax.ShapeDtypeStruct((n_pad, c_pad), f32),
                   jax.ShapeDtypeStruct((8, c_pad), f32),
                   jax.ShapeDtypeStruct((8, c_pad), f32)),
        grid=(grid_n,),
        in_specs=[
            pl.BlockSpec((tn, ch_in), lambda i: (i, 0)),      # x: tiled over N
            pl.BlockSpec((ch_in, c_pad), lambda i: (0, 0)),   # W: resident
            pl.BlockSpec((1, c_pad), lambda i: (0, 0)),       # bias: resident
        ],
        out_specs=(
            pl.BlockSpec((tn, c_pad), lambda i: (i, 0)),      # h: tiled over N
            pl.BlockSpec((8, c_pad), lambda i: (0, 0)),       # sum accumulator
            pl.BlockSpec((8, c_pad), lambda i: (0, 0)),       # sumsq accumulator
        ),
        compiler_params=pltpu.CompilerParams(
            dimension_semantics=("arbitrary",)),              # sequential accum
    )(x_p, w_p, b_p)

    # ---- finalize BN stats (tiny (1, C) math) and fold the affine ----
    inv_n = 1.0 / n
    mean = jnp.sum(sum8, axis=0, keepdims=True) * inv_n
    var = jnp.sum(ssq8, axis=0, keepdims=True) * inv_n - mean * mean  # biased
    inv_std = lax.rsqrt(var + EPS)
    scale = g_p * inv_std
    shift = be_p - mean * scale
    scale_shift = jnp.concatenate([scale, shift], axis=0)     # (2, c_pad)

    # ---- pass 2: y = h * scale + shift ----
    y = pl.pallas_call(
        normalize_kernel,
        out_shape=jax.ShapeDtypeStruct((n_pad, c_pad), f32),
        grid=(grid_n,),
        in_specs=[
            pl.BlockSpec((tn, c_pad), lambda i: (i, 0)),      # h: tiled over N
            pl.BlockSpec((2, c_pad), lambda i: (0, 0)),       # scale/shift: resident
        ],
        out_specs=pl.BlockSpec((tn, c_pad), lambda i: (i, 0)),
        compiler_params=pltpu.CompilerParams(
            dimension_semantics=("parallel",)),               # independent tiles
    )(h, scale_shift)

    return y[:n, :ch_out]


def reference(x, w, b, gamma, beta):
    h = jnp.maximum(x @ w + b, 0.0)
    mean = jnp.mean(h, axis=0, keepdims=True)
    var = jnp.mean((h - mean) ** 2, axis=0, keepdims=True)
    return (h - mean) * lax.rsqrt(var + EPS) * gamma + beta


if __name__ == "__main__":
    key = jax.random.PRNGKey(0)

    def run_case(n, ch_in, ch_out):
        kx, kw, kb = jax.random.split(jax.random.fold_in(key, n), 3)
        x = jax.random.normal(kx, (n, ch_in), dtype=jnp.float32)
        bound = 1.0 / (ch_in ** 0.5)   # PyTorch-style Linear init bound
        w = jax.random.uniform(kw, (ch_in, ch_out), jnp.float32, -bound, bound)
        b = jax.random.uniform(kb, (1, ch_out), jnp.float32, -bound, bound)
        gamma = jnp.ones((1, ch_out), jnp.float32)   # BatchNorm1d weight init
        beta = jnp.zeros((1, ch_out), jnp.float32)   # BatchNorm1d bias init

        out = jax.block_until_ready(
            fully_connected_layer(x, w, b, gamma, beta))
        ref = reference(x, w, b, gamma, beta)
        assert out.shape == (n, ch_out)
        err = jnp.max(jnp.abs(out - ref))
        assert jnp.allclose(out, ref, atol=1e-4, rtol=1e-4), (
            f"mismatch vs reference (N={n}): max err {err}")

    run_case(512, 32, 16)   # multi-tile batch: grid over N, no row padding
    run_case(37, 32, 16)    # ragged batch: exercises the masked-stats path
    print("KERNEL_OK")
</pallas_src>

<mosaic_0001>
module attributes {stable_mosaic.version = 11 : i64} {
  func.func @linear_relu_stats_kernel(%arg0: i32, %arg1: memref<256x32xf32, #tpu.memory_space<vmem>>, %arg2: memref<32x128xf32, #tpu.memory_space<vmem>>, %arg3: memref<1x128xf32, #tpu.memory_space<vmem>>, %arg4: memref<256x128xf32, #tpu.memory_space<vmem>>, %arg5: memref<8x128xf32, #tpu.memory_space<vmem>>, %arg6: memref<8x128xf32, #tpu.memory_space<vmem>>) attributes {dimension_semantics = [#tpu.dimension_semantics<arbitrary>], iteration_bounds = array<i64: 2>, scalar_prefetch = 0 : i64, scratch_operands = 0 : i64, tpu.core_type = #tpu.core_type<tc>, window_params = [{transform_indices = @transform_0, window_bounds = array<i64: 256, 32>}, {pipeline_mode = #tpu.pipeline_mode<synchronous>, transform_indices = @transform_1, window_bounds = array<i64: 32, 128>}, {pipeline_mode = #tpu.pipeline_mode<synchronous>, transform_indices = @transform_2, window_bounds = array<i64: 1, 128>}, {transform_indices = @transform_3, window_bounds = array<i64: 256, 128>}, {pipeline_mode = #tpu.pipeline_mode<synchronous>, transform_indices = @transform_4, window_bounds = array<i64: 8, 128>}, {pipeline_mode = #tpu.pipeline_mode<synchronous>, transform_indices = @transform_5, window_bounds = array<i64: 8, 128>}]} {
    %c0 = arith.constant 0 : index
    %c0_0 = arith.constant 0 : index
    %0 = vector.load %arg1[%c0, %c0_0] : memref<256x32xf32, #tpu.memory_space<vmem>>, vector<256x32xf32>
    %c0_1 = arith.constant 0 : index
    %c0_2 = arith.constant 0 : index
    %1 = vector.load %arg2[%c0_1, %c0_2] : memref<32x128xf32, #tpu.memory_space<vmem>>, vector<32x128xf32>
    %cst = arith.constant dense<0.000000e+00> : vector<256x128xf32>
    %2 = tpu.matmul %0, %1, %cst {dimension_numbers = #tpu.dot_dimension_numbers<[1], [0], [0], [1], [0, 0, 1, 1], [], []>} : vector<256x32xf32>, vector<32x128xf32>, vector<256x128xf32> -> vector<256x128xf32>
    %c0_3 = arith.constant 0 : index
    %c0_4 = arith.constant 0 : index
    %3 = vector.load %arg3[%c0_3, %c0_4] : memref<1x128xf32, #tpu.memory_space<vmem>>, vector<1x128xf32>
    %4 = vector.broadcast %3 : vector<1x128xf32> to vector<256x128xf32>
    %5 = arith.addf %2, %4 : vector<256x128xf32>
    %cst_5 = arith.constant 0.000000e+00 : f32
    %6 = vector.broadcast %cst_5 : f32 to vector<256x128xf32>
    %7 = arith.maximumf %5, %6 : vector<256x128xf32>
    %c0_6 = arith.constant 0 : index
    %c0_7 = arith.constant 0 : index
    %8 = vector.load %arg4[%c0_6, %c0_7] : memref<256x128xf32, #tpu.memory_space<vmem>>, vector<256x128xf32>
    tpu.vector_store %arg4[%c0_6, %c0_7], %7 {strides = array<i32>} : memref<256x128xf32, #tpu.memory_space<vmem>>, vector<256x128xf32>,
    %c0_i32 = arith.constant 0 : i32
    %9 = arith.cmpi eq, %arg0, %c0_i32 : i32
    %10 = arith.extui %9 : i1 to i32
    %c0_i32_8 = arith.constant 0 : i32
    %11 = arith.cmpi ne, %10, %c0_i32_8 : i32
    scf.if %11 {
      %cst_19 = arith.constant 0.000000e+00 : f32
      %22 = vector.broadcast %cst_19 : f32 to vector<8x128xf32>
      %c0_20 = arith.constant 0 : index
      %c0_21 = arith.constant 0 : index
      %23 = vector.load %arg5[%c0_20, %c0_21] : memref<8x128xf32, #tpu.memory_space<vmem>>, vector<8x128xf32>
      tpu.vector_store %arg5[%c0_20, %c0_21], %22 {strides = array<i32>} : memref<8x128xf32, #tpu.memory_space<vmem>>, vector<8x128xf32>,
      %cst_22 = arith.constant 0.000000e+00 : f32
      %24 = vector.broadcast %cst_22 : f32 to vector<8x128xf32>
      %c0_23 = arith.constant 0 : index
      %c0_24 = arith.constant 0 : index
      %25 = vector.load %arg6[%c0_23, %c0_24] : memref<8x128xf32, #tpu.memory_space<vmem>>, vector<8x128xf32>
      tpu.vector_store %arg6[%c0_23, %c0_24], %24 {strides = array<i32>} : memref<8x128xf32, #tpu.memory_space<vmem>>, vector<8x128xf32>,
    } else {
    }
    %12 = vector.shape_cast %7 : vector<256x128xf32> to vector<32x8x128xf32>
    %c0_9 = arith.constant 0 : index
    %c0_10 = arith.constant 0 : index
    %13 = vector.load %arg5[%c0_9, %c0_10] : memref<8x128xf32, #tpu.memory_space<vmem>>, vector<8x128xf32>
    %cst_11 = arith.constant dense<0.000000e+00> : vector<8x128xf32>
    %14 = vector.multi_reduction <add>, %12, %cst_11 [0] : vector<32x8x128xf32> to vector<8x128xf32>
    %15 = arith.addf %13, %14 : vector<8x128xf32>
    %c0_12 = arith.constant 0 : index
    %c0_13 = arith.constant 0 : index
    %16 = vector.load %arg5[%c0_12, %c0_13] : memref<8x128xf32, #tpu.memory_space<vmem>>, vector<8x128xf32>
    tpu.vector_store %arg5[%c0_12, %c0_13], %15 {strides = array<i32>} : memref<8x128xf32, #tpu.memory_space<vmem>>, vector<8x128xf32>,
    %c0_14 = arith.constant 0 : index
    %c0_15 = arith.constant 0 : index
    %17 = vector.load %arg6[%c0_14, %c0_15] : memref<8x128xf32, #tpu.memory_space<vmem>>, vector<8x128xf32>
    %18 = arith.mulf %12, %12 : vector<32x8x128xf32>
    %cst_16 = arith.constant dense<0.000000e+00> : vector<8x128xf32>
    %19 = vector.multi_reduction <add>, %18, %cst_16 [0] : vector<32x8x128xf32> to vector<8x128xf32>
    %20 = arith.addf %17, %19 : vector<8x128xf32>
    %c0_17 = arith.constant 0 : index
    %c0_18 = arith.constant 0 : index
    %21 = vector.load %arg6[%c0_17, %c0_18] : memref<8x128xf32, #tpu.memory_space<vmem>>, vector<8x128xf32>
    tpu.vector_store %arg6[%c0_17, %c0_18], %20 {strides = array<i32>} : memref<8x128xf32, #tpu.memory_space<vmem>>, vector<8x128xf32>,
    return
  }
  func.func @transform_0(%arg0: i32) -> (i32, i32) {
    %c0_i32 = arith.constant 0 : i32
    %c0_i32_0 = arith.constant 0 : i32
    return %arg0, %c0_i32 : i32, i32
  }
  func.func @transform_1(%arg0: i32) -> (i32, i32) {
    %c0_i32 = arith.constant 0 : i32
    %c0_i32_0 = arith.constant 0 : i32
    %c0_i32_1 = arith.constant 0 : i32
    return %c0_i32, %c0_i32_0 : i32, i32
  }
  func.func @transform_2(%arg0: i32) -> (i32, i32) {
    %c0_i32 = arith.constant 0 : i32
    %c0_i32_0 = arith.constant 0 : i32
    %c0_i32_1 = arith.constant 0 : i32
    return %c0_i32, %c0_i32_0 : i32, i32
  }
  func.func @transform_3(%arg0: i32) -> (i32, i32) {
    %c0_i32 = arith.constant 0 : i32
    %c0_i32_0 = arith.constant 0 : i32
    return %arg0, %c0_i32 : i32, i32
  }
  func.func @transform_4(%arg0: i32) -> (i32, i32) {
    %c0_i32 = arith.constant 0 : i32
    %c0_i32_0 = arith.constant 0 : i32
    %c0_i32_1 = arith.constant 0 : i32
    return %c0_i32, %c0_i32_0 : i32, i32
  }
  func.func @transform_5(%arg0: i32) -> (i32, i32) {
    %c0_i32 = arith.constant 0 : i32
    %c0_i32_0 = arith.constant 0 : i32
    %c0_i32_1 = arith.constant 0 : i32
    return %c0_i32, %c0_i32_0 : i32, i32
  }
}

</mosaic_0001>

<llo_original>
// kernel: tpu_custom_call.1
$region0: #{tpu_custom_call.1}
  #allocation0 [shape = 'u32[]', space=smem, size = 0x4, offset = 0x4, fixed_abs, tag = 'smem constant byte address 0x4 - core index']
  #allocation1 [shape = 'u32[144,128]{1,0:T(1,128)}', space=vmem, size = 0x12000, scoped, tag = 'internal scratch']
  %s0 = inlined_call_operand.vmem [shape: f32[512,32], index: 0, kind: input, shape index: {}]
  %s1 = inlined_call_operand.vmem [shape: f32[32,128], index: 1, kind: input, shape index: {}]
  %s2 = inlined_call_operand.vmem [shape: f32[1,128], index: 2, kind: input, shape index: {}]
  %s3 = inlined_call_operand.hbm [shape: f32[512,128], index: 3, kind: output, shape index: {0}]
  %s4 = inlined_call_operand.hbm [shape: f32[8,128], index: 4, kind: output, shape index: {1}]
  %s5 = inlined_call_operand.hbm [shape: f32[8,128], index: 5, kind: output, shape index: {2}]
  %6 = xla_tuple %s3, %s4, %s5
  %s7 = sld [smem:[#allocation0]]
  $region65: #{tpu_custom_call.1} parent=0
    _
  %s9 = ssub.s32 1, %s7
  %s10 = scalar_select 0, %s9, %s7
  $region1: #{tpu_custom_call.1} parent=0
    #allocation2 [shape = 'u8[262144]{0}', space=vmem, size = 0x40000, scoped, tag = 'output window, operand 0']
    #allocation3 [shape = 's32[2]{0}', space=sflag, size = 0x8, scoped, tag = 'scoped memory for tpu_custom_call.1']
    #allocation4 [shape = 'u8[4096]{0}', space=vmem, size = 0x1000, scoped, tag = 'output window, operand 1, single buffered']
    #allocation5 [shape = 's32[1]{0}', space=sflag, size = 0x4, scoped, tag = 'scoped memory for tpu_custom_call.1']
    #allocation6 [shape = 'u8[4096]{0}', space=vmem, size = 0x1000, scoped, tag = 'output window, operand 2, single buffered']
    %11 = vsyncpa [#allocation3], 0
    %s12 = scalar_lea.sflag [#allocation3], 1
    %13 = vsyncpa %s12, 0
    %14 = vsyncpa [#allocation5], 0
    loop: start=0, step=1, limit=4
    $region2: #{tpu_custom_call.1} parent=1 // loop_pre_header
      _
    $region3: #{tpu_custom_call.1} parent=1 // loop_header
      %s16 = sphi 0, %s20
      %p17 = scmp.ge.s32.totalorder %s16, 4
      %s26 = sphi 0, %s28
      %s29 = sphi 0, %s26
      %s30 = sphi 0, %s29
      %s46 = sphi 0, %s30
      %s50 = sphi 0, %s50
      %s52 = sphi 0, %s50
      %s53 = sphi 0, %s52
      %s67 = sphi 0, %s53
      %s71 = sphi 0, %s71
      %s73 = sphi 0, %s71
      %s74 = sphi 0, %s73
      %s88 = sphi 0, %s74
      %s94 = sphi 0, %s96
      %s97 = sphi 0, %s94
      %s98 = sphi 0, %s97
      %s114 = sphi 0, %s98
      %s118 = sphi 0, %s118
      %s120 = sphi 0, %s118
      %s121 = sphi 0, %s120
      %s135 = sphi 0, %s121
      %s139 = sphi 0, %s139
      %s141 = sphi 0, %s139
      %s142 = sphi 0, %s141
      %s156 = sphi 0, %s142
    $region4: #{tpu_custom_call.1} parent=1 // loop_header_branch
      %19 = sbr.rel (%p17) target = $region8
    $region5: #{tpu_custom_call.1} parent=1 // loop_body
      %s21 = ssub.s32 %s16, 1
      %s22 = ssub.s32 %s16, 2
      %s23 = sadd.s32 %s16, 1
      %s24 = ssub.s32 %s16, %s23
      %p25 = scmp.eq.s32.totalorder %s24, 0
      %s27 = sadd.s32 %s26, 1
      %s28 = scalar_select %p25, %s26, %s27
      %p31 = pneg %p25
      %p32 = scmp.eq.s32.totalorder %s16, 1
      %p33 = por %p31, %p32
      %p34 = scmp.ne.s32.totalorder %s26, %s29
      %p35 = scmp.eq.s32.totalorder %s16, 0
      %p36 = por %p34, %p35
      %p37 = scmp.ne.s32.totalorder %s26, %s29
      %p38 = scmp.eq.s32.totalorder %s21, 1
      %p39 = por %p37, %p38
      %p40 = scmp.ne.s32.totalorder %s29, %s30
      %p41 = scmp.eq.s32.totalorder %s21, 0
      %p42 = por %p40, %p41
      %p43 = scmp.ne.s32.totalorder %s29, %s30
      %p44 = scmp.eq.s32.totalorder %s22, 1
      %p45 = por %p43, %p44
      %p47 = scmp.ne.s32.totalorder %s30, %s46
      %p48 = scmp.eq.s32.totalorder %s22, 0
      %p49 = por %p47, %p48
      %s51 = sadd.s32 %s50, 1
      %p54 = scmp.eq.s32.totalorder %s16, 1
      %p55 = scmp.ne.s32.totalorder %s50, %s52
      %p56 = scmp.eq.s32.totalorder %s16, 0
      %p57 = por %p55, %p56
      %p58 = scmp.ne.s32.totalorder %s50, %s52
      %p59 = scmp.eq.s32.totalorder %s21, 1
      %p60 = por %p58, %p59
      %p61 = scmp.ne.s32.totalorder %s52, %s53
      %p62 = scmp.eq.s32.totalorder %s21, 0
      %p63 = por %p61, %p62
      %p64 = scmp.ne.s32.totalorder %s52, %s53
      %p65 = scmp.eq.s32.totalorder %s22, 1
      %p66 = por %p64, %p65
      %p68 = scmp.ne.s32.totalorder %s53, %s67
      %p69 = scmp.eq.s32.totalorder %s22, 0
      %p70 = por %p68, %p69
      %s72 = sadd.s32 %s71, 1
      %p75 = scmp.eq.s32.totalorder %s16, 1
      %p76 = scmp.ne.s32.totalorder %s71, %s73
      %p77 = scmp.eq.s32.totalorder %s16, 0
      %p78 = por %p76, %p77
      %p79 = scmp.ne.s32.totalorder %s71, %s73
      %p80 = scmp.eq.s32.totalorder %s21, 1
      %p81 = por %p79, %p80
      %p82 = scmp.ne.s32.totalorder %s73, %s74
      %p83 = scmp.eq.s32.totalorder %s21, 0
      %p84 = por %p82, %p83
      %p85 = scmp.ne.s32.totalorder %s73, %s74
      %p86 = scmp.eq.s32.totalorder %s22, 1
      %p87 = por %p85, %p86
      %p89 = scmp.ne.s32.totalorder %s74, %s88
      %p90 = scmp.eq.s32.totalorder %s22, 0
      %p91 = por %p89, %p90
      %s92 = ssub.s32 %s16, %s23
      %p93 = scmp.eq.s32.totalorder %s92, 0
      %s95 = sadd.s32 %s94, 1
      %s96 = scalar_select %p93, %s94, %s95
      %p99 = pneg %p93
      %p100 = scmp.eq.s32.totalorder %s16, 1
      %p101 = por %p99, %p100
      %p102 = scmp.ne.s32.totalorder %s94, %s97
      %p103 = scmp.eq.s32.totalorder %s16, 0
      %p104 = por %p102, %p103
      %p105 = scmp.ne.s32.totalorder %s94, %s97
      %p106 = scmp.eq.s32.totalorder %s21, 1
      %p107 = por %p105, %p106
      %p108 = scmp.ne.s32.totalorder %s97, %s98
      %p109 = scmp.eq.s32.totalorder %s21, 0
      %p110 = por %p108, %p109
      %p111 = scmp.ne.s32.totalorder %s97, %s98
      %p112 = scmp.eq.s32.totalorder %s22, 1
      %p113 = por %p111, %p112
      %p115 = scmp.ne.s32.totalorder %s98, %s114
      %p116 = scmp.eq.s32.totalorder %s22, 0
      %p117 = por %p115, %p116
      %s119 = sadd.s32 %s118, 1
      %p122 = scmp.eq.s32.totalorder %s16, 1
      %p123 = scmp.ne.s32.totalorder %s118, %s120
      %p124 = scmp.eq.s32.totalorder %s16, 0
      %p125 = por %p123, %p124
      %p126 = scmp.ne.s32.totalorder %s118, %s120
      %p127 = scmp.eq.s32.totalorder %s21, 1
      %p128 = por %p126, %p127
      %p129 = scmp.ne.s32.totalorder %s120, %s121
      %p130 = scmp.eq.s32.totalorder %s21, 0
      %p131 = por %p129, %p130
      %p132 = scmp.ne.s32.totalorder %s120, %s121
      %p133 = scmp.eq.s32.totalorder %s22, 1
      %p134 = por %p132, %p133
      %p136 = scmp.ne.s32.totalorder %s121, %s135
      %p137 = scmp.eq.s32.totalorder %s22, 0
      %p138 = por %p136, %p137
      %s140 = sadd.s32 %s139, 1
      %p143 = scmp.eq.s32.totalorder %s16, 1
      %p144 = scmp.ne.s32.totalorder %s139, %s141
      %p145 = scmp.eq.s32.totalorder %s16, 0
      %p146 = por %p144, %p145
      %p147 = scmp.ne.s32.totalorder %s139, %s141
      %p148 = scmp.eq.s32.totalorder %s21, 1
      %p149 = por %p147, %p148
      %p150 = scmp.ne.s32.totalorder %s141, %s142
      %p151 = scmp.eq.s32.totalorder %s21, 0
      %p152 = por %p150, %p151
      %p153 = scmp.ne.s32.totalorder %s141, %s142
      %p154 = scmp.eq.s32.totalorder %s22, 1
      %p155 = por %p153, %p154
      %p157 = scmp.ne.s32.totalorder %s142, %s156
      %p158 = scmp.eq.s32.totalorder %s22, 0
      %p159 = por %p157, %p158
      %p160 = scmp.le.s32.totalorder 1, %s16
      %p161 = scmp.lt.s32.totalorder %s16, 3
      %p162 = pnand %p160, %p161
      %p163 = pneg %p162
      // Predicated region
      $region9: #{tpu_custom_call.1} parent=5 // pred_check
        _
      $region10: #{tpu_custom_call.1} parent=5 // pred_check_branch
        %165 = sbr.rel (%p162) target = $region12
      $region11: #{tpu_custom_call.1} parent=5 // pred_region
        %s166 = ssub.s32 %s16, 1
        // Predicated region
        $region13: #{tpu_custom_call.1} parent=11 // pred_check
          %p167 = pneg %p63
        $region14: #{tpu_custom_call.1} parent=11 // pred_check_branch
          %169 = sbr.rel (%p167) target = $region16
        $region15: #{tpu_custom_call.1} parent=11 // pred_region
          _
        $region16: #{tpu_custom_call.1} parent=11 // pred_fallthru
          _
        // Predicated region
        $region17: #{tpu_custom_call.1} parent=11 // pred_check
          %p170 = pneg %p84
        $region18: #{tpu_custom_call.1} parent=11 // pred_check_branch
          %172 = sbr.rel (%p170) target = $region20
        $region19: #{tpu_custom_call.1} parent=11 // pred_region
          _
        $region20: #{tpu_custom_call.1} parent=11 // pred_fallthru
          _
      $region12: #{tpu_custom_call.1} parent=5 // pred_fallthru
        _
      %p173 = scmp.lt.s32.totalorder %s16, 2
      // Predicated region
      $region21: #{tpu_custom_call.1} parent=5 // pred_check
        %p174 = pneg %p173
      $region22: #{tpu_custom_call.1} parent=5 // pred_check_branch
        %176 = sbr.rel (%p174) target = $region24
      $region23: #{tpu_custom_call.1} parent=5 // pred_region
        // Predicated region
        $region25: #{tpu_custom_call.1} parent=23 // pred_check
          %p177 = pneg %p36
        $region26: #{tpu_custom_call.1} parent=23 // pred_check_branch
          %179 = sbr.rel (%p177) target = $region28
        $region27: #{tpu_custom_call.1} parent=23 // pred_region
          %s180 = smul.u32 32, %s16
          %p181 = scmp.lt.s32.totalorder %s180, 63
          %s182 = scalar_select %p181, %s180, 63
          %s183 = smul.addr %s182, 8
          %s184 = scalar_lea.vmem %s0, %s183
          %s185 = smul.u32 32, %s16
        $region28: #{tpu_custom_call.1} parent=23 // pred_fallthru
          _
      $region24: #{tpu_custom_call.1} parent=5 // pred_fallthru
        _
      %p186 = scmp.le.s32.totalorder 1, %s16
      %p187 = scmp.lt.s32.totalorder %s16, 3
      %p188 = pnand %p186, %p187
      %p189 = pneg %p188
      // Predicated region
      $region29: #{tpu_custom_call.1} parent=5 // pred_check
        _
      $region30: #{tpu_custom_call.1} parent=5 // pred_check_branch
        %191 = sbr.rel (%p188) target = $region32
      $region31: #{tpu_custom_call.1} parent=5 // pred_region
        %s192 = ssub.s32 %s16, 1
        %s193 = smul.u32 32, %s21
        %p194 = scmp.lt.s32.totalorder %s193, 63
        %s195 = scalar_select %p194, %s193, 63
        %s196 = smul.addr %s195, 8
        %s197 = scalar_lea.vmem %s0, %s196
        %p198 = pneg %p42
        %p199 = pneg %p39
        %p200 = pneg %p63
        %p201 = pneg %p60
        %p202 = pneg %p84
        %p203 = pneg %p81
        %p204 = pneg %p110
        %p205 = pneg %p107
        %s206 = sand.u32 %s97, 1
        %s207 = scalar_lea.sflag [#allocation3], %s206
        %s208 = sand.u32 %s97, 1
        %s209 = smul.addr %s208, 256
        %s210 = scalar_lea.vmem [#allocation2], %s209
        %p211 = pneg %p131
        %p212 = pneg %p128
        %p213 = pneg %p152
        %p214 = pneg %p149
        %s215 = smul.u32 32, %s21
        %p216 = scmp.lt.s32.totalorder %s215, 63
        %s217 = scalar_select %p216, %s215, 63
        %s218 = smul.addr %s217, 8
        %s219 = scalar_lea.vmem %s0, %s218
        %s220 = smul.u32 32, %s21
        %s221 = smul.u32 32, %s21
        %v222 = vld [vmem:[%s219] sm:$0xff]
        %v223 = vld [vmem:[%s219 + $0x8] sm:$0xff]
        %v224 = vld [vmem:[%s219 + $0x10] sm:$0xff]
        %v225 = vld [vmem:[%s219 + $0x18] sm:$0xff]
        %v226 = vld [vmem:[%s219 + $0x20] sm:$0xff]
        %v227 = vld [vmem:[%s219 + $0x28] sm:$0xff]
        %v228 = vld [vmem:[%s219 + $0x30] sm:$0xff]
        %v229 = vld [vmem:[%s219 + $0x38] sm:$0xff]
        %v230 = vld [vmem:[%s219 + $0x40] sm:$0xff]
        %v231 = vld [vmem:[%s219 + $0x48] sm:$0xff]
        %v232 = vld [vmem:[%s219 + $0x50] sm:$0xff]
        %v233 = vld [vmem:[%s219 + $0x58] sm:$0xff]
        %v234 = vld [vmem:[%s219 + $0x60] sm:$0xff]
        %v235 = vld [vmem:[%s219 + $0x68] sm:$0xff]
        %v236 = vld [vmem:[%s219 + $0x70] sm:$0xff]
        %v237 = vld [vmem:[%s219 + $0x78] sm:$0xff]
        %v238 = vld [vmem:[%s219 + $0x80] sm:$0xff]
        %v239 = vld [vmem:[%s219 + $0x88] sm:$0xff]
        %v240 = vld [vmem:[%s219 + $0x90] sm:$0xff]
        %v241 = vld [vmem:[%s219 + $0x98] sm:$0xff]
        %v242 = vld [vmem:[%s219 + $0xa0] sm:$0xff]
        %v243 = vld [vmem:[%s219 + $0xa8] sm:$0xff]
        %v244 = vld [vmem:[%s219 + $0xb0] sm:$0xff]
        %v245 = vld [vmem:[%s219 + $0xb8] sm:$0xff]
        %v246 = vld [vmem:[%s219 + $0xc0] sm:$0xff]
        %v247 = vld [vmem:[%s219 + $0xc8] sm:$0xff]
        %v248 = vld [vmem:[%s219 + $0xd0] sm:$0xff]
        %v249 = vld [vmem:[%s219 + $0xd8] sm:$0xff]
        %v250 = vld [vmem:[%s219 + $0xe0] sm:$0xff]
        %v251 = vld [vmem:[%s219 + $0xe8] sm:$0xff]
        %v252 = vld [vmem:[%s219 + $0xf0] sm:$0xff]
        %v253 = vld [vmem:[%s219 + $0xf8] sm:$0xff]
        %v254 = vld [vmem:[%s1] sm:$0xff]
        %v255 = vld [vmem:[%s1 + $0x8] sm:$0xff]
        %v256 = vld [vmem:[%s1 + $0x10] sm:$0xff]
        %v257 = vld [vmem:[%s1 + $0x18] sm:$0xff]
        %v258 = vld [vmem:[%s2] sm:$0x1]
        %v260 = vlaneseq
        %v261 = vshrl.u32 %v260, 7
        %v262 = vsub.s32 0, %v261
        %v263 = vrot.slane %v258, %v262
        %vm265 = vcmask 261120
        %v267 = vsel %vm265, %v222, 0
        %v270 = vsel %vm265, %v223, 0
        %v273 = vsel %vm265, %v224, 0
        %v276 = vsel %vm265, %v225, 0
        %v279 = vsel %vm265, %v226, 0
        %v282 = vsel %vm265, %v227, 0
        %v285 = vsel %vm265, %v228, 0
        %v288 = vsel %vm265, %v229, 0
        %v291 = vsel %vm265, %v230, 0
        %v294 = vsel %vm265, %v231, 0
        %v297 = vsel %vm265, %v232, 0
        %v300 = vsel %vm265, %v233, 0
        %v303 = vsel %vm265, %v234, 0
        %v306 = vsel %vm265, %v235, 0
        %v309 = vsel %vm265, %v236, 0
        %v312 = vsel %vm265, %v237, 0
        %v315 = vsel %vm265, %v238, 0
        %v318 = vsel %vm265, %v239, 0
        %v321 = vsel %vm265, %v240, 0
        %v324 = vsel %vm265, %v241, 0
        %v327 = vsel %vm265, %v242, 0
        %v330 = vsel %vm265, %v243, 0
        %v333 = vsel %vm265, %v244, 0
        %v336 = vsel %vm265, %v245, 0
        %v339 = vsel %vm265, %v246, 0
        %v342 = vsel %vm265, %v247, 0
        %v345 = vsel %vm265, %v248, 0
        %v348 = vsel %vm265, %v249, 0
        %v351 = vsel %vm265, %v250, 0
        %v354 = vsel %vm265, %v251, 0
        %v357 = vsel %vm265, %v252, 0
        %v360 = vsel %vm265, %v253, 0
        %362 = vmatprep.subr.mxu0 0.0
        %363 = vmatpush1.msra.mxu0 %v254
        %364 = vmatprep.subr.mxu0 0.0
        %365 = vmatpush1.msra.mxu0 %v255
        %366 = vmatprep.subr.mxu0 0.0
        %367 = vmatpush1.msra.mxu0 %v256
        %368 = vmatprep.subr.mxu0 0.0
        %369 = vmatpush1.msra.mxu0 %v257
        %370 = vmatprep.subr.mxu0 0.0
        %371 = vmatpush1.msra.mxu0 0.0
        %372 = vmatprep.subr.mxu0 0.0
        %373 = vmatpush1.msra.mxu0 0.0
        %374 = vmatprep.subr.mxu0 0.0
        %375 = vmatpush1.msra.mxu0 0.0
        %376 = vmatprep.subr.mxu0 0.0
        %377 = vmatpush1.msra.mxu0 0.0
        %378 = vmatprep.subr.mxu0 0.0
        %379 = vmatpush1.msra.mxu0 0.0
        %380 = vmatprep.subr.mxu0 0.0
        %381 = vmatpush1.msra.mxu0 0.0
        %382 = vmatprep.subr.mxu0 0.0
        %383 = vmatpush1.msra.mxu0 0.0
        %384 = vmatprep.subr.mxu0 0.0
        %385 = vmatpush1.msra.mxu0 0.0
        %386 = vmatprep.subr.mxu0 0.0
        %387 = vmatpush1.msra.mxu0 0.0
        %388 = vmatprep.subr.mxu0 0.0
        %389 = vmatpush1.msra.mxu0 0.0
        %390 = vmatprep.subr.mxu0 0.0
        %391 = vmatpush1.msra.mxu0 0.0
        %392 = vmatprep.subr.mxu0 0.0
        %393 = vmatpush1.msra.mxu0 0.0
        %394 = vmatprep.subr.mxu0 0.0
        %395 = vmatpush1.msra.mxu0 0.0
        %396 = vmatprep.subr.mxu0 0.0
        %397 = vmatpush1.msra.mxu0 0.0
        %398 = vmatprep.subr.mxu0 0.0
        %399 = vmatpush1.msra.mxu0 0.0
        %400 = vmatprep.subr.mxu0 0.0
        %401 = vmatpush1.msra.mxu0 0.0
        %402 = vmatprep.subr.mxu0 0.0
        %403 = vmatpush1.msra.mxu0 0.0
        %404 = vmatprep.subr.mxu0 0.0
        %405 = vmatpush1.msra.mxu0 0.0
        %406 = vmatprep.subr.mxu0 0.0
        %407 = vmatpush1.msra.mxu0 0.0
        %408 = vmatprep.subr.mxu0 0.0
        %409 = vmatpush1.msra.mxu0 0.0
        %410 = vmatprep.subr.mxu0 0.0
        %411 = vmatpush1.msra.mxu0 0.0
        %412 = vmatprep.subr.mxu0 0.0
        %413 = vmatpush1.msra.mxu0 0.0
        %414 = vmatprep.subr.mxu0 0.0
        %415 = vmatpush1.msra.mxu0 0.0
        %416 = vmatprep.subr.mxu0 0.0
        %417 = vmatpush1.msra.mxu0 0.0
        %418 = vmatprep.subr.mxu0 0.0
        %419 = vmatpush1.msra.mxu0 0.0
        %420 = vmatprep.subr.mxu0 0.0
        %421 = vmatpush1.msra.mxu0 0.0
        %422 = vmatprep.subr.mxu0 0.0
        %423 = vmatpush1.msra.mxu0 0.0
        %424 = vmatprep.subr.mxu0 0.0
        %425 = vmatpush1.msra.mxu0 0.0
        %426 = vmatprep.mubr.f32.mxu0 0.0
        %427 = vmatmul.mubr.f32.gmra.mrb[0].mxu0 %v267
        %v428 = vpop.f32.mrb[0].mxu0
        %v429 = vadd.f32 %v263, %v428
        %v430 = vpop.f32.mrb[0].mxu0
        %431 = vmatprep.mubr.f32.mxu0 0.0
        %432 = vmatmul.mubr.f32.gmra.mrb[0].mxu0 %v270
        %v433 = vpop.f32.mrb[0].mxu0
        %v434 = vadd.f32 %v263, %v433
        %v435 = vpop.f32.mrb[0].mxu0
        %436 = vmatprep.mubr.f32.mxu0 0.0
        %437 = vmatmul.mubr.f32.gmra.mrb[0].mxu0 %v273
        %v438 = vpop.f32.mrb[0].mxu0
        %v439 = vadd.f32 %v263, %v438
        %v440 = vpop.f32.mrb[0].mxu0
        %441 = vmatprep.mubr.f32.mxu0 0.0
        %442 = vmatmul.mubr.f32.gmra.mrb[0].mxu0 %v276
        %v443 = vpop.f32.mrb[0].mxu0
        %v444 = vadd.f32 %v263, %v443
        %v445 = vpop.f32.mrb[0].mxu0
        %446 = vmatprep.mubr.f32.mxu0 0.0
        %447 = vmatmul.mubr.f32.gmra.mrb[0].mxu0 %v279
        %v448 = vpop.f32.mrb[0].mxu0
        %v449 = vadd.f32 %v263, %v448
        %v450 = vpop.f32.mrb[0].mxu0
        %451 = vmatprep.mubr.f32.mxu0 0.0
        %452 = vmatmul.mubr.f32.gmra.mrb[0].mxu0 %v282
        %v453 = vpop.f32.mrb[0].mxu0
        %v454 = vadd.f32 %v263, %v453
        %v455 = vpop.f32.mrb[0].mxu0
        %456 = vmatprep.mubr.f32.mxu0 0.0
        %457 = vmatmul.mubr.f32.gmra.mrb[0].mxu0 %v285
        %v458 = vpop.f32.mrb[0].mxu0
        %v459 = vadd.f32 %v263, %v458
        %v460 = vpop.f32.mrb[0].mxu0
        %461 = vmatprep.mubr.f32.mxu0 0.0
        %462 = vmatmul.mubr.f32.gmra.mrb[0].mxu0 %v288
        %v463 = vpop.f32.mrb[0].mxu0
        %v464 = vadd.f32 %v263, %v463
        %v465 = vpop.f32.mrb[0].mxu0
        %466 = vmatprep.mubr.f32.mxu0 0.0
        %467 = vmatmul.mubr.f32.gmra.mrb[0].mxu0 %v291
        %v468 = vpop.f32.mrb[0].mxu0
        %v469 = vadd.f32 %v263, %v468
        %v470 = vpop.f32.mrb[0].mxu0
        %471 = vmatprep.mubr.f32.mxu0 0.0
        %472 = vmatmul.mubr.f32.gmra.mrb[0].mxu0 %v294
        %v473 = vpop.f32.mrb[0].mxu0
        %v474 = vadd.f32 %v263, %v473
        %v475 = vpop.f32.mrb[0].mxu0
        %476 = vmatprep.mubr.f32.mxu0 0.0
        %477 = vmatmul.mubr.f32.gmra.mrb[0].mxu0 %v297
        %v478 = vpop.f32.mrb[0].mxu0
        %v479 = vadd.f32 %v263, %v478
        %v480 = vpop.f32.mrb[0].mxu0
        %481 = vmatprep.mubr.f32.mxu0 0.0
        %482 = vmatmul.mubr.f32.gmra.mrb[0].mxu0 %v300
        %v483 = vpop.f32.mrb[0].mxu0
        %v484 = vadd.f32 %v263, %v483
        %v485 = vpop.f32.mrb[0].mxu0
        %486 = vmatprep.mubr.f32.mxu0 0.0
        %487 = vmatmul.mubr.f32.gmra.mrb[0].mxu0 %v303
        %v488 = vpop.f32.mrb[0].mxu0
        %v489 = vadd.f32 %v263, %v488
        %v490 = vpop.f32.mrb[0].mxu0
        %491 = vmatprep.mubr.f32.mxu0 0.0
        %492 = vmatmul.mubr.f32.gmra.mrb[0].mxu0 %v306
        %v493 = vpop.f32.mrb[0].mxu0
        %v494 = vadd.f32 %v263, %v493
        %v495 = vpop.f32.mrb[0].mxu0
        %496 = vmatprep.mubr.f32.mxu0 0.0
        %497 = vmatmul.mubr.f32.gmra.mrb[0].mxu0 %v309
        %v498 = vpop.f32.mrb[0].mxu0
        %v499 = vadd.f32 %v263, %v498
        %v500 = vpop.f32.mrb[0].mxu0
        %501 = vmatprep.mubr.f32.mxu0 0.0
        %502 = vmatmul.mubr.f32.gmra.mrb[0].mxu0 %v312
        %v503 = vpop.f32.mrb[0].mxu0
        %v504 = vadd.f32 %v263, %v503
        %v505 = vpop.f32.mrb[0].mxu0
        %506 = vmatprep.mubr.f32.mxu0 0.0
        %507 = vmatmul.mubr.f32.gmra.mrb[0].mxu0 %v315
        %v508 = vpop.f32.mrb[0].mxu0
        %v509 = vadd.f32 %v263, %v508
        %v510 = vpop.f32.mrb[0].mxu0
        %511 = vmatprep.mubr.f32.mxu0 0.0
        %512 = vmatmul.mubr.f32.gmra.mrb[0].mxu0 %v318
        %v513 = vpop.f32.mrb[0].mxu0
        %v514 = vadd.f32 %v263, %v513
        %v515 = vpop.f32.mrb[0].mxu0
        %516 = vmatprep.mubr.f32.mxu0 0.0
        %517 = vmatmul.mubr.f32.gmra.mrb[0].mxu0 %v321
        %v518 = vpop.f32.mrb[0].mxu0
        %v519 = vadd.f32 %v263, %v518
        %v520 = vpop.f32.mrb[0].mxu0
        %521 = vmatprep.mubr.f32.mxu0 0.0
        %522 = vmatmul.mubr.f32.gmra.mrb[0].mxu0 %v324
        %v523 = vpop.f32.mrb[0].mxu0
        %v524 = vadd.f32 %v263, %v523
        %v525 = vpop.f32.mrb[0].mxu0
        %526 = vmatprep.mubr.f32.mxu0 0.0
        %527 = vmatmul.mubr.f32.gmra.mrb[0].mxu0 %v327
        %v528 = vpop.f32.mrb[0].mxu0
        %v529 = vadd.f32 %v263, %v528
        %v530 = vpop.f32.mrb[0].mxu0
        %531 = vmatprep.mubr.f32.mxu0 0.0
        %532 = vmatmul.mubr.f32.gmra.mrb[0].mxu0 %v330
        %v533 = vpop.f32.mrb[0].mxu0
        %v534 = vadd.f32 %v263, %v533
        %v535 = vpop.f32.mrb[0].mxu0
        %536 = vmatprep.mubr.f32.mxu0 0.0
        %537 = vmatmul.mubr.f32.gmra.mrb[0].mxu0 %v333
        %v538 = vpop.f32.mrb[0].mxu0
        %v539 = vadd.f32 %v263, %v538
        %v540 = vpop.f32.mrb[0].mxu0
        %541 = vmatprep.mubr.f32.mxu0 0.0
        %542 = vmatmul.mubr.f32.gmra.mrb[0].mxu0 %v336
        %v543 = vpop.f32.mrb[0].mxu0
        %v544 = vadd.f32 %v263, %v543
        %v545 = vpop.f32.mrb[0].mxu0
        %546 = vmatprep.mubr.f32.mxu0 0.0
        %547 = vmatmul.mubr.f32.gmra.mrb[0].mxu0 %v339
        %v548 = vpop.f32.mrb[0].mxu0
        %v549 = vadd.f32 %v263, %v548
        %v550 = vpop.f32.mrb[0].mxu0
        %551 = vmatprep.mubr.f32.mxu0 0.0
        %552 = vmatmul.mubr.f32.gmra.mrb[0].mxu0 %v342
        %v553 = vpop.f32.mrb[0].mxu0
        %v554 = vadd.f32 %v263, %v553
        %v555 = vpop.f32.mrb[0].mxu0
        %556 = vmatprep.mubr.f32.mxu0 0.0
        %557 = vmatmul.mubr.f32.gmra.mrb[0].mxu0 %v345
        %v558 = vpop.f32.mrb[0].mxu0
        %v559 = vadd.f32 %v263, %v558
        %v560 = vpop.f32.mrb[0].mxu0
        %561 = vmatprep.mubr.f32.mxu0 0.0
        %562 = vmatmul.mubr.f32.gmra.mrb[0].mxu0 %v348
        %v563 = vpop.f32.mrb[0].mxu0
        %v564 = vadd.f32 %v263, %v563
        %v565 = vpop.f32.mrb[0].mxu0
        %566 = vmatprep.mubr.f32.mxu0 0.0
        %567 = vmatmul.mubr.f32.gmra.mrb[0].mxu0 %v351
        %v568 = vpop.f32.mrb[0].mxu0
        %v569 = vadd.f32 %v263, %v568
        %v570 = vpop.f32.mrb[0].mxu0
        %571 = vmatprep.mubr.f32.mxu0 0.0
        %572 = vmatmul.mubr.f32.gmra.mrb[0].mxu0 %v354
        %v573 = vpop.f32.mrb[0].mxu0
        %v574 = vadd.f32 %v263, %v573
        %v575 = vpop.f32.mrb[0].mxu0
        %576 = vmatprep.mubr.f32.mxu0 0.0
        %577 = vmatmul.mubr.f32.gmra.mrb[0].mxu0 %v357
        %v578 = vpop.f32.mrb[0].mxu0
        %v579 = vadd.f32 %v263, %v578
        %v580 = vpop.f32.mrb[0].mxu0
        %581 = vmatprep.mubr.f32.mxu0 0.0
        %582 = vmatmul.mubr.f32.gmra.mrb[0].mxu0 %v360
        %v583 = vpop.f32.mrb[0].mxu0
        %v584 = vadd.f32 %v263, %v583
        %v585 = vpop.f32.mrb[0].mxu0
        %586 = vdwg.mxu0
        %v587 = vmax.f32 %v429, 0.0
        %v588 = vmax.f32 %v434, 0.0
        %v589 = vmax.f32 %v439, 0.0
        %v590 = vmax.f32 %v444, 0.0
        %v591 = vmax.f32 %v449, 0.0
        %v592 = vmax.f32 %v454, 0.0
        %v593 = vmax.f32 %v459, 0.0
        %v594 = vmax.f32 %v464, 0.0
        %v595 = vmax.f32 %v469, 0.0
        %v596 = vmax.f32 %v474, 0.0
        %v597 = vmax.f32 %v479, 0.0
        %v598 = vmax.f32 %v484, 0.0
        %v599 = vmax.f32 %v489, 0.0
        %v600 = vmax.f32 %v494, 0.0
        %v601 = vmax.f32 %v499, 0.0
        %v602 = vmax.f32 %v504, 0.0
        %v603 = vmax.f32 %v509, 0.0
        %v604 = vmax.f32 %v514, 0.0
        %v605 = vmax.f32 %v519, 0.0
        %v606 = vmax.f32 %v524, 0.0
        %v607 = vmax.f32 %v529, 0.0
        %v608 = vmax.f32 %v534, 0.0
        %v609 = vmax.f32 %v539, 0.0
        %v610 = vmax.f32 %v544, 0.0
        %v611 = vmax.f32 %v549, 0.0
        %v612 = vmax.f32 %v554, 0.0
        %v613 = vmax.f32 %v559, 0.0
        %v614 = vmax.f32 %v564, 0.0
        %v615 = vmax.f32 %v569, 0.0
        %v616 = vmax.f32 %v574, 0.0
        %v617 = vmax.f32 %v579, 0.0
        %v618 = vmax.f32 %v584, 0.0
        %619 = vst [vmem:[%s210] sm:$0xff] %v587
        %620 = vst [vmem:[%s210 + $0x8] sm:$0xff] %v588
        %621 = vst [vmem:[%s210 + $0x10] sm:$0xff] %v589
        %622 = vst [vmem:[%s210 + $0x18] sm:$0xff] %v590
        %623 = vst [vmem:[%s210 + $0x20] sm:$0xff] %v591
        %624 = vst [vmem:[%s210 + $0x28] sm:$0xff] %v592
        %625 = vst [vmem:[%s210 + $0x30] sm:$0xff] %v593
        %626 = vst [vmem:[%s210 + $0x38] sm:$0xff] %v594
        %627 = vst [vmem:[%s210 + $0x40] sm:$0xff] %v595
        %628 = vst [vmem:[%s210 + $0x48] sm:$0xff] %v596
        %629 = vst [vmem:[%s210 + $0x50] sm:$0xff] %v597
        %630 = vst [vmem:[%s210 + $0x58] sm:$0xff] %v598
        %631 = vst [vmem:[%s210 + $0x60] sm:$0xff] %v599
        %632 = vst [vmem:[%s210 + $0x68] sm:$0xff] %v600
        %633 = vst [vmem:[%s210 + $0x70] sm:$0xff] %v601
        %634 = vst [vmem:[%s210 + $0x78] sm:$0xff] %v602
        %635 = vst [vmem:[%s210 + $0x80] sm:$0xff] %v603
        %636 = vst [vmem:[%s210 + $0x88] sm:$0xff] %v604
        %637 = vst [vmem:[%s210 + $0x90] sm:$0xff] %v605
        %638 = vst [vmem:[%s210 + $0x98] sm:$0xff] %v606
        %639 = vst [vmem:[%s210 + $0xa0] sm:$0xff] %v607
        %640 = vst [vmem:[%s210 + $0xa8] sm:$0xff] %v608
        %641 = vst [vmem:[%s210 + $0xb0] sm:$0xff] %v609
        %642 = vst [vmem:[%s210 + $0xb8] sm:$0xff] %v610
        %643 = vst [vmem:[%s210 + $0xc0] sm:$0xff] %v611
        %644 = vst [vmem:[%s210 + $0xc8] sm:$0xff] %v612
        %645 = vst [vmem:[%s210 + $0xd0] sm:$0xff] %v613
        %646 = vst [vmem:[%s210 + $0xd8] sm:$0xff] %v614
        %647 = vst [vmem:[%s210 + $0xe0] sm:$0xff] %v615
        %648 = vst [vmem:[%s210 + $0xe8] sm:$0xff] %v616
        %649 = vst [vmem:[%s210 + $0xf0] sm:$0xff] %v617
        %650 = vst [vmem:[%s210 + $0xf8] sm:$0xff] %v618
        %p651 = scmp.eq.s32.totalorder %s21, 0
        // Predicated region
        $region33: #{tpu_custom_call.1} parent=31 // pred_check
          %p652 = pneg %p651
        $region34: #{tpu_custom_call.1} parent=31 // pred_check_branch
          %654 = sbr.rel (%p652) target = $region36
        $region35: #{tpu_custom_call.1} parent=31 // pred_region
          %655 = vst [vmem:[#allocation4] sm:$0xff] 0.0
          %656 = vst [vmem:[#allocation6] sm:$0xff] 0.0
        $region36: #{tpu_custom_call.1} parent=31 // pred_fallthru
          _
        %v657 = vld [vmem:[#allocation4] sm:$0xff]
        %v658 = vadd.f32 %v587, %v588
        %v659 = vadd.f32 %v658, %v589
        %v660 = vadd.f32 %v659, %v590
        %v661 = vadd.f32 %v660, %v591
        %v662 = vadd.f32 %v661, %v592
        %v663 = vadd.f32 %v662, %v593
        %v664 = vadd.f32 %v663, %v594
        %v665 = vadd.f32 %v664, %v595
        %v666 = vadd.f32 %v665, %v596
        %v667 = vadd.f32 %v666, %v597
        %v668 = vadd.f32 %v667, %v598
        %v669 = vadd.f32 %v668, %v599
        %v670 = vadd.f32 %v669, %v600
        %v671 = vadd.f32 %v670, %v601
        %v672 = vadd.f32 %v671, %v602
        %v673 = vadd.f32 %v672, %v603
        %v674 = vadd.f32 %v673, %v604
        %v675 = vadd.f32 %v674, %v605
        %v676 = vadd.f32 %v675, %v606
        %v677 = vadd.f32 %v676, %v607
        %v678 = vadd.f32 %v677, %v608
        %v679 = vadd.f32 %v678, %v609
        %v680 = vadd.f32 %v679, %v610
        %v681 = vadd.f32 %v680, %v611
        %v682 = vadd.f32 %v681, %v612
        %v683 = vadd.f32 %v682, %v613
        %v684 = vadd.f32 %v683, %v614
        %v685 = vadd.f32 %v684, %v615
        %v686 = vadd.f32 %v685, %v616
        %v687 = vadd.f32 %v686, %v617
        %v688 = vadd.f32 %v687, %v618
        %v689 = vadd.f32 %v657, %v688
        %690 = vst [vmem:[#allocation4] sm:$0xff] %v689
        %v691 = vld [vmem:[#allocation6] sm:$0xff]
        %v692 = vmul.f32 %v587, %v587
        %v693 = vmul.f32 %v588, %v588
        %v694 = vmul.f32 %v589, %v589
        %v695 = vmul.f32 %v590, %v590
        %v696 = vmul.f32 %v591, %v591
        %v697 = vmul.f32 %v592, %v592
        %v698 = vmul.f32 %v593, %v593
        %v699 = vmul.f32 %v594, %v594
        %v700 = vmul.f32 %v595, %v595
        %v701 = vmul.f32 %v596, %v596
        %v702 = vmul.f32 %v597, %v597
        %v703 = vmul.f32 %v598, %v598
        %v704 = vmul.f32 %v599, %v599
        %v705 = vmul.f32 %v600, %v600
        %v706 = vmul.f32 %v601, %v601
        %v707 = vmul.f32 %v602, %v602
        %v708 = vmul.f32 %v603, %v603
        %v709 = vmul.f32 %v604, %v604
        %v710 = vmul.f32 %v605, %v605
        %v711 = vmul.f32 %v606, %v606
        %v712 = vmul.f32 %v607, %v607
        %v713 = vmul.f32 %v608, %v608
        %v714 = vmul.f32 %v609, %v609
        %v715 = vmul.f32 %v610, %v610
        %v716 = vmul.f32 %v611, %v611
        %v717 = vmul.f32 %v612, %v612
        %v718 = vmul.f32 %v613, %v613
        %v719 = vmul.f32 %v614, %v614
        %v720 = vmul.f32 %v615, %v615
        %v721 = vmul.f32 %v616, %v616
        %v722 = vmul.f32 %v617, %v617
        %v723 = vmul.f32 %v618, %v618
        %v724 = vadd.f32 %v692, %v693
        %v725 = vadd.f32 %v724, %v694
        %v726 = vadd.f32 %v725, %v695
        %v727 = vadd.f32 %v726, %v696
        %v728 = vadd.f32 %v727, %v697
        %v729 = vadd.f32 %v728, %v698
        %v730 = vadd.f32 %v729, %v699
        %v731 = vadd.f32 %v730, %v700
        %v732 = vadd.f32 %v731, %v701
        %v733 = vadd.f32 %v732, %v702
        %v734 = vadd.f32 %v733, %v703
        %v735 = vadd.f32 %v734, %v704
        %v736 = vadd.f32 %v735, %v705
        %v737 = vadd.f32 %v736, %v706
        %v738 = vadd.f32 %v737, %v707
        %v739 = vadd.f32 %v738, %v708
        %v740 = vadd.f32 %v739, %v709
        %v741 = vadd.f32 %v740, %v710
        %v742 = vadd.f32 %v741, %v711
        %v743 = vadd.f32 %v742, %v712
        %v744 = vadd.f32 %v743, %v713
        %v745 = vadd.f32 %v744, %v714
        %v746 = vadd.f32 %v745, %v715
        %v747 = vadd.f32 %v746, %v716
        %v748 = vadd.f32 %v747, %v717
        %v749 = vadd.f32 %v748, %v718
        %v750 = vadd.f32 %v749, %v719
        %v751 = vadd.f32 %v750, %v720
        %v752 = vadd.f32 %v751, %v721
        %v753 = vadd.f32 %v752, %v722
        %v754 = vadd.f32 %v753, %v723
        %v755 = vadd.f32 %v691, %v754
        %756 = vst [vmem:[#allocation6] sm:$0xff] %v755
        %s757 = sand.u32 %s97, 1
        %s758 = scalar_lea.sflag [#allocation3], %s757
        %s759 = sand.u32 %s97, 1
        %s760 = smul.addr %s759, 256
        %s761 = scalar_lea.vmem [#allocation2], %s760
        // Predicated region
        $region37: #{tpu_custom_call.1} parent=31 // pred_check
          %p762 = pneg %p107
        $region38: #{tpu_custom_call.1} parent=31 // pred_check_branch
          %764 = sbr.rel (%p762) target = $region40
        $region39: #{tpu_custom_call.1} parent=31 // pred_region
          %s765 = smul.u32 32, %s21
          %s767 = ssub.s32 4096, 4096
          %768 = vsyncadd %s758, %s767
          %s769 = smul.addr %s765, 128
          %s770 = scalar_lea.hbm %s3, %s769
          %s771 = sshll.u32 %s761, 4
          %s772 = int_to_ptr.vmem [resolvable:$true] %s771
          %777 = dma.vmem_to_hbm [thread:$0]  %s772, 4096, %s770, %s758, 128, 128, 8
        $region40: #{tpu_custom_call.1} parent=31 // pred_fallthru
          _
        // Predicated region
        $region41: #{tpu_custom_call.1} parent=31 // pred_check
          %p778 = pneg %p128
        $region42: #{tpu_custom_call.1} parent=31 // pred_check_branch
          %780 = sbr.rel (%p778) target = $region44
        $region43: #{tpu_custom_call.1} parent=31 // pred_region
          %s782 = ssub.s32 128, 128
          %783 = vsyncadd [#allocation5], %s782
          %s785 = sshll.u32 [#allocation4], 4
          %s786 = int_to_ptr.vmem [resolvable:$true] %s785
          %788 = dma.vmem_to_hbm [thread:$0]  %s786, 128, %s4, [#allocation5]
        $region44: #{tpu_custom_call.1} parent=31 // pred_fallthru
          _
        // Predicated region
        $region45: #{tpu_custom_call.1} parent=31 // pred_check
          %p789 = pneg %p149
        $region46: #{tpu_custom_call.1} parent=31 // pred_check_branch
          %791 = sbr.rel (%p789) target = $region48
        $region47: #{tpu_custom_call.1} parent=31 // pred_region
          %s793 = ssub.s32 128, 128
          %794 = vsyncadd [#allocation5], %s793
          %s796 = sshll.u32 [#allocation6], 4
          %s797 = int_to_ptr.vmem [resolvable:$true] %s796
          %799 = dma.vmem_to_hbm [thread:$0]  %s797, 128, %s5, [#allocation5]
        $region48: #{tpu_custom_call.1} parent=31 // pred_fallthru
          _
        // Predicated region
        $region49: #{tpu_custom_call.1} parent=31 // pred_check
          %p800 = pneg %p128
        $region50: #{tpu_custom_call.1} parent=31 // pred_check_branch
          %802 = sbr.rel (%p800) target = $region52
        $region51: #{tpu_custom_call.1} parent=31 // pred_region
          %803 = dma.done [#allocation5], 128
        $region52: #{tpu_custom_call.1} parent=31 // pred_fallthru
          _
        // Predicated region
        $region53: #{tpu_custom_call.1} parent=31 // pred_check
          %p804 = pneg %p149
        $region54: #{tpu_custom_call.1} parent=31 // pred_check_branch
          %806 = sbr.rel (%p804) target = $region56
        $region55: #{tpu_custom_call.1} parent=31 // pred_region
          %807 = dma.done [#allocation5], 128
        $region56: #{tpu_custom_call.1} parent=31 // pred_fallthru
          _
      $region32: #{tpu_custom_call.1} parent=5 // pred_fallthru
        _
      %p808 = scmp.le.s32.totalorder 2, %s16
      // Predicated region
      $region57: #{tpu_custom_call.1} parent=5 // pred_check
        %p809 = pneg %p808
      $region58: #{tpu_custom_call.1} parent=5 // pred_check_branch
        %811 = sbr.rel (%p809) target = $region60
      $region59: #{tpu_custom_call.1} parent=5 // pred_region
        %s812 = ssub.s32 %s16, 2
        // Predicated region
        $region61: #{tpu_custom_call.1} parent=59 // pred_check
          %p813 = pneg %p113
        $region62: #{tpu_custom_call.1} parent=59 // pred_check_branch
          %815 = sbr.rel (%p813) target = $region64
        $region63: #{tpu_custom_call.1} parent=59 // pred_region
          %s816 = sand.u32 %s98, 1
          %s817 = scalar_lea.sflag [#allocation3], %s816
          %s818 = sand.u32 %s98, 1
          %s819 = smul.addr %s818, 256
          %s820 = scalar_lea.vmem [#allocation2], %s819
          %821 = dma.done %s817, 4096
        $region64: #{tpu_custom_call.1} parent=59 // pred_fallthru
          _
      $region60: #{tpu_custom_call.1} parent=5 // pred_fallthru
        _
    $region6: #{tpu_custom_call.1} parent=1 // loop_footer
      %s20 = sadd.s32 1, %s16
    $region7: #{tpu_custom_call.1} parent=1 // loop_footer_branch
      %15 = sbr.rel target = $region3
    $region8: #{tpu_custom_call.1} parent=1 // loop_exit
      _
    %822 = vsyncpa [#allocation3], 1
    %s823 = scalar_lea.sflag [#allocation3], 1
    %824 = vsyncpa %s823, 1
    %825 = vsyncpa [#allocation5], 1

</llo_original>
